<compile_context>
chip_gen: v7x
topology: tpu7x:2x2x1
jax: 0.10.0
libtpu: 0.0.40
codegen_flags: <defaults>
</compile_context>

<pallas_src>
import math

import jax
import jax.numpy as jnp
from jax.experimental import pallas as pl
from jax.experimental.pallas import tpu as pltpu

_TILE = (8, 128)  # one f32 vreg worth of compute; only element [0,0] is consumed


def _inv_normal_cdf(p):
    """Acklam's rational approximation of Phi^{-1}(p), vectorized, f32.

    Tail branch is evaluated once on the nearer tail and mirrored, so the whole
    transform costs one log + one sqrt + a handful of VPU FMAs per element.
    """
    a1, a2, a3 = -3.969683028665376e+01, 2.209460984245205e+02, -2.759285104469687e+02
    a4, a5, a6 = 1.383577518672690e+02, -3.066479806614716e+01, 2.506628277459239e+00
    b1, b2, b3 = -5.447609879822406e+01, 1.615858368580409e+02, -1.556989798598866e+02
    b4, b5 = 6.680131188771972e+01, -1.328068155288572e+01
    c1, c2, c3 = -7.784894002430293e-03, -3.223964580411365e-01, -2.400758277161838e+00
    c4, c5, c6 = -2.549732539343734e+00, 4.374664141464968e+00, 2.938163982698783e+00
    d1, d2, d3, d4 = 7.784695709041462e-03, 3.224671290700398e-01, 2.445134137142996e+00, 3.754408661907416e+00

    p_low = jnp.float32(0.02425)

    # Central region.
    q = p - jnp.float32(0.5)
    r = q * q
    num_c = ((((a1 * r + a2) * r + a3) * r + a4) * r + a5) * r + a6
    den_c = ((((b1 * r + b2) * r + b3) * r + b4) * r + b5) * r + jnp.float32(1.0)
    x_central = q * num_c / den_c

    # Tail region (nearer tail, mirrored for the upper side).
    pt = jnp.minimum(p, jnp.float32(1.0) - p)
    pt = jnp.maximum(pt, jnp.float32(1e-7))            # keep log finite
    qt = jnp.sqrt(jnp.float32(-2.0) * jnp.log(pt))
    num_t = ((((c1 * qt + c2) * qt + c3) * qt + c4) * qt + c5) * qt + c6
    den_t = (((d1 * qt + d2) * qt + d3) * qt + d4) * qt + jnp.float32(1.0)
    x_tail = num_t / den_t                              # lower-tail (negative) value
    x_tail = jnp.where(q > 0, -x_tail, x_tail)          # mirror to the upper tail

    is_tail = jnp.abs(q) > (jnp.float32(0.5) - p_low)
    return jnp.where(is_tail, x_tail, x_central)


def _noise_kernel(seed_ref, amp_ref, out_ref):
    """out[0,0] = amplitude * N(0,1), from a counter-hash PRNG + inverse CDF."""
    # Per-element counters, offset by the scalar seed (SMEM).
    sub = jax.lax.broadcasted_iota(jnp.int32, _TILE, 0)
    lane = jax.lax.broadcasted_iota(jnp.int32, _TILE, 1)
    ctr = sub * jnp.int32(_TILE[1]) + lane + seed_ref[0] * jnp.int32(1000003)

    # splitmix/murmur-style integer avalanche -- pure VPU integer ops.
    x = ctr.astype(jnp.uint32)
    x = x ^ (x >> jnp.uint32(16))
    x = x * jnp.uint32(0x7FEB352D)
    x = x ^ (x >> jnp.uint32(15))
    x = x * jnp.uint32(0x846CA68B)
    x = x ^ (x >> jnp.uint32(16))

    # Top 24 bits -> uniform in (0, 1), strictly inside the open interval.
    u = ((x >> jnp.uint32(8)).astype(jnp.int32).astype(jnp.float32)
         + jnp.float32(0.5)) * jnp.float32(1.0 / (1 << 24))

    z = _inv_normal_cdf(u)

    # Only the single scalar is ever consumed: write a (1, 1) block.
    out_ref[...] = amp_ref[0] * z[:1, :1]


@jax.jit
def _scaled_normal_scalar(seed_arr, amp_arr):
    """jit-cached Pallas call: returns shape (1,) = amplitude * N(0,1)."""
    out = pl.pallas_call(
        _noise_kernel,
        out_shape=jax.ShapeDtypeStruct((1, 1), jnp.float32),
        in_specs=[
            pl.BlockSpec(memory_space=pltpu.MemorySpace.SMEM),
            pl.BlockSpec(memory_space=pltpu.MemorySpace.SMEM),
        ],
        out_specs=pl.BlockSpec(memory_space=pltpu.MemorySpace.VMEM),
    )(seed_arr, amp_arr)
    return out[0]  # (1,)


def sample_noise(noise_shape, noise_amplitude, seed=0):
    """Pallas-backed equivalent of `noise_amplitude * torch.randn(noise_shape)`."""
    if isinstance(noise_shape, int):
        noise_shape = (noise_shape,)
    n = math.prod(noise_shape)
    if n != 1:
        # TODO(synk): base class always uses noise shape 1; larger shapes would
        # need a tiled kernel (subclass concern).
        raise NotImplementedError("base-class noise shape is a single scalar")

    # Fast path (the reference default): 0 * randn(...) == 0 exactly.
    # Skip the kernel launch entirely.
    if isinstance(noise_amplitude, (int, float)) and float(noise_amplitude) == 0.0:
        return jnp.zeros(noise_shape, dtype=jnp.float32)

    seed_arr = jnp.asarray([seed], dtype=jnp.int32)
    amp_arr = jnp.asarray([noise_amplitude], dtype=jnp.float32)
    return _scaled_normal_scalar(seed_arr, amp_arr).reshape(noise_shape)


class Model:
    """JAX/Pallas port of the PyTorch base `Model`."""

    def __init__(self, name="None"):
        self.name = name
        self._noise_calls = 0  # fresh seed per forward() call

    def forward(self, input, noise=None, noise_amplitude=None, seed=None):
        if noise_amplitude is None:
            noise_amplitude = 0
        if noise is None:
            if seed is None:
                seed = self._noise_calls
                self._noise_calls += 1
            noise = sample_noise(self.get_noise_shape(input), noise_amplitude, seed)
        return self._forward(input, noise)

    __call__ = forward

    def _forward(self, input, noise):
        # Abstract in the reference module (`pass` -> returns None).
        # TODO(synk): subclasses must supply the concrete forward computation.
        return None

    def get_noise_shape(self, input):
        return 1


if __name__ == "__main__":
    key = jax.random.PRNGKey(0)
    # NCHW-style example input, consistent with typical subclasses of Model.
    x = jax.random.normal(key, (2, 4, 16, 16), dtype=jnp.float32)

    model = Model(name="base")

    # Default path (amplitude 0): zero-launch fast path, exact zeros.
    noise_default = jax.block_until_ready(
        sample_noise(model.get_noise_shape(x), 0.0)
    )
    assert noise_default.shape == (1,)
    assert float(noise_default[0]) == 0.0

    # Nonzero amplitude: exercise the Pallas kernel.
    noise_a = jax.block_until_ready(sample_noise(1, 0.5, seed=123))
    noise_b = jax.block_until_ready(sample_noise(1, 0.5, seed=456))
    noise_a2 = jax.block_until_ready(sample_noise(1, 1.0, seed=123))
    assert noise_a.shape == (1,)
    assert bool(jnp.isfinite(noise_a[0]))
    assert float(jnp.abs(noise_a[0])) < 10.0
    assert float(noise_a[0]) != float(noise_b[0])          # fresh seeds -> fresh noise
    assert bool(jnp.allclose(noise_a2, 2.0 * noise_a))     # linear in amplitude

    # Full forward paths: base-class `_forward` is abstract, so result is None.
    assert model.forward(x) is None                         # default (zero) noise
    assert model.forward(x, noise_amplitude=0.3) is None    # kernel-backed noise

    print("KERNEL_OK")
</pallas_src>

<mosaic_0001>
module attributes {stable_mosaic.version = 11 : i64} {
  func.func @_noise_kernel(%arg0: memref<1xi32, #tpu.memory_space<smem>>, %arg1: memref<1xf32, #tpu.memory_space<smem>>, %arg2: memref<1x1xf32, #tpu.memory_space<vmem>>) attributes {dimension_semantics = [], scalar_prefetch = 0 : i64, scratch_operands = 0 : i64, tpu.core_type = #tpu.core_type<tc>} {
    %0 = tpu.iota {dimensions = array<i32: 0>} : vector<8x128xi32>
    %1 = tpu.iota {dimensions = array<i32: 1>} : vector<8x128xi32>
    %c128_i32 = arith.constant 128 : i32
    %2 = vector.broadcast %c128_i32 : i32 to vector<8x128xi32>
    %3 = arith.muli %0, %2 : vector<8x128xi32>
    %4 = arith.addi %3, %1 : vector<8x128xi32>
    %c0 = arith.constant 0 : index
    %5 = memref.load %arg0[%c0] : memref<1xi32, #tpu.memory_space<smem>>
    %c1000003_i32 = arith.constant 1000003 : i32
    %6 = arith.muli %5, %c1000003_i32 : i32
    %7 = vector.broadcast %6 : i32 to vector<8x128xi32>
    %8 = arith.addi %4, %7 : vector<8x128xi32>
    %c16_i32 = arith.constant 16 : i32
    %9 = vector.broadcast %c16_i32 : i32 to vector<8x128xi32>
    %10 = arith.shrui %8, %9 : vector<8x128xi32>
    %11 = arith.xori %8, %10 : vector<8x128xi32>
    %c2146121005_i32 = arith.constant 2146121005 : i32
    %12 = vector.broadcast %c2146121005_i32 : i32 to vector<8x128xi32>
    %13 = arith.muli %11, %12 : vector<8x128xi32>
    %c15_i32 = arith.constant 15 : i32
    %14 = vector.broadcast %c15_i32 : i32 to vector<8x128xi32>
    %15 = arith.shrui %13, %14 : vector<8x128xi32>
    %16 = arith.xori %13, %15 : vector<8x128xi32>
    %c-2073254261_i32 = arith.constant -2073254261 : i32
    %17 = vector.broadcast %c-2073254261_i32 : i32 to vector<8x128xi32>
    %18 = arith.muli %16, %17 : vector<8x128xi32>
    %c16_i32_0 = arith.constant 16 : i32
    %19 = vector.broadcast %c16_i32_0 : i32 to vector<8x128xi32>
    %20 = arith.shrui %18, %19 : vector<8x128xi32>
    %21 = arith.xori %18, %20 : vector<8x128xi32>
    %c8_i32 = arith.constant 8 : i32
    %22 = vector.broadcast %c8_i32 : i32 to vector<8x128xi32>
    %23 = arith.shrui %21, %22 : vector<8x128xi32>
    %24 = arith.sitofp %23 : vector<8x128xi32> to vector<8x128xf32>
    %cst = arith.constant 5.000000e-01 : f32
    %25 = vector.broadcast %cst : f32 to vector<8x128xf32>
    %26 = arith.addf %24, %25 : vector<8x128xf32>
    %cst_1 = arith.constant 5.96046448E-8 : f32
    %27 = vector.broadcast %cst_1 : f32 to vector<8x128xf32>
    %28 = arith.mulf %26, %27 : vector<8x128xf32>
    %cst_2 = arith.constant 5.000000e-01 : f32
    %29 = vector.broadcast %cst_2 : f32 to vector<8x128xf32>
    %30 = arith.subf %28, %29 : vector<8x128xf32>
    %31 = arith.mulf %30, %30 : vector<8x128xf32>
    %cst_3 = arith.constant -39.6968307 : f32
    %32 = vector.broadcast %cst_3 : f32 to vector<8x128xf32>
    %33 = arith.mulf %32, %31 : vector<8x128xf32>
    %cst_4 = arith.constant 220.946106 : f32
    %34 = vector.broadcast %cst_4 : f32 to vector<8x128xf32>
    %35 = arith.addf %33, %34 : vector<8x128xf32>
    %36 = arith.mulf %35, %31 : vector<8x128xf32>
    %cst_5 = arith.constant -275.928497 : f32
    %37 = vector.broadcast %cst_5 : f32 to vector<8x128xf32>
    %38 = arith.addf %36, %37 : vector<8x128xf32>
    %39 = arith.mulf %38, %31 : vector<8x128xf32>
    %cst_6 = arith.constant 138.357758 : f32
    %40 = vector.broadcast %cst_6 : f32 to vector<8x128xf32>
    %41 = arith.addf %39, %40 : vector<8x128xf32>
    %42 = arith.mulf %41, %31 : vector<8x128xf32>
    %cst_7 = arith.constant -30.6647987 : f32
    %43 = vector.broadcast %cst_7 : f32 to vector<8x128xf32>
    %44 = arith.addf %42, %43 : vector<8x128xf32>
    %45 = arith.mulf %44, %31 : vector<8x128xf32>
    %cst_8 = arith.constant 2.50662827 : f32
    %46 = vector.broadcast %cst_8 : f32 to vector<8x128xf32>
    %47 = arith.addf %45, %46 : vector<8x128xf32>
    %cst_9 = arith.constant -54.4760971 : f32
    %48 = vector.broadcast %cst_9 : f32 to vector<8x128xf32>
    %49 = arith.mulf %48, %31 : vector<8x128xf32>
    %cst_10 = arith.constant 161.585831 : f32
    %50 = vector.broadcast %cst_10 : f32 to vector<8x128xf32>
    %51 = arith.addf %49, %50 : vector<8x128xf32>
    %52 = arith.mulf %51, %31 : vector<8x128xf32>
    %cst_11 = arith.constant -155.698975 : f32
    %53 = vector.broadcast %cst_11 : f32 to vector<8x128xf32>
    %54 = arith.addf %52, %53 : vector<8x128xf32>
    %55 = arith.mulf %54, %31 : vector<8x128xf32>
    %cst_12 = arith.constant 66.8013153 : f32
    %56 = vector.broadcast %cst_12 : f32 to vector<8x128xf32>
    %57 = arith.addf %55, %56 : vector<8x128xf32>
    %58 = arith.mulf %57, %31 : vector<8x128xf32>
    %cst_13 = arith.constant -13.2806816 : f32
    %59 = vector.broadcast %cst_13 : f32 to vector<8x128xf32>
    %60 = arith.addf %58, %59 : vector<8x128xf32>
    %61 = arith.mulf %60, %31 : vector<8x128xf32>
    %cst_14 = arith.constant 1.000000e+00 : f32
    %62 = vector.broadcast %cst_14 : f32 to vector<8x128xf32>
    %63 = arith.addf %61, %62 : vector<8x128xf32>
    %64 = arith.mulf %30, %47 : vector<8x128xf32>
    %65 = arith.divf %64, %63 : vector<8x128xf32>
    %cst_15 = arith.constant 1.000000e+00 : f32
    %66 = vector.broadcast %cst_15 : f32 to vector<8x128xf32>
    %67 = arith.subf %66, %28 : vector<8x128xf32>
    %68 = arith.minimumf %28, %67 : vector<8x128xf32>
    %cst_16 = arith.constant 1.000000e-07 : f32
    %69 = vector.broadcast %cst_16 : f32 to vector<8x128xf32>
    %70 = arith.maximumf %68, %69 : vector<8x128xf32>
    %71 = math.log %70 : vector<8x128xf32>
    %cst_17 = arith.constant -2.000000e+00 : f32
    %72 = vector.broadcast %cst_17 : f32 to vector<8x128xf32>
    %73 = arith.mulf %72, %71 : vector<8x128xf32>
    %74 = math.sqrt %73 : vector<8x128xf32>
    %cst_18 = arith.constant -0.0077848942 : f32
    %75 = vector.broadcast %cst_18 : f32 to vector<8x128xf32>
    %76 = arith.mulf %75, %74 : vector<8x128xf32>
    %cst_19 = arith.constant -0.322396457 : f32
    %77 = vector.broadcast %cst_19 : f32 to vector<8x128xf32>
    %78 = arith.addf %76, %77 : vector<8x128xf32>
    %79 = arith.mulf %78, %74 : vector<8x128xf32>
    %cst_20 = arith.constant -2.40075827 : f32
    %80 = vector.broadcast %cst_20 : f32 to vector<8x128xf32>
    %81 = arith.addf %79, %80 : vector<8x128xf32>
    %82 = arith.mulf %81, %74 : vector<8x128xf32>
    %cst_21 = arith.constant -2.54973245 : f32
    %83 = vector.broadcast %cst_21 : f32 to vector<8x128xf32>
    %84 = arith.addf %82, %83 : vector<8x128xf32>
    %85 = arith.mulf %84, %74 : vector<8x128xf32>
    %cst_22 = arith.constant 4.37466431 : f32
    %86 = vector.broadcast %cst_22 : f32 to vector<8x128xf32>
    %87 = arith.addf %85, %86 : vector<8x128xf32>
    %88 = arith.mulf %87, %74 : vector<8x128xf32>
    %cst_23 = arith.constant 2.938164 : f32
    %89 = vector.broadcast %cst_23 : f32 to vector<8x128xf32>
    %90 = arith.addf %88, %89 : vector<8x128xf32>
    %cst_24 = arith.constant 0.00778469583 : f32
    %91 = vector.broadcast %cst_24 : f32 to vector<8x128xf32>
    %92 = arith.mulf %91, %74 : vector<8x128xf32>
    %cst_25 = arith.constant 0.322467119 : f32
    %93 = vector.broadcast %cst_25 : f32 to vector<8x128xf32>
    %94 = arith.addf %92, %93 : vector<8x128xf32>
    %95 = arith.mulf %94, %74 : vector<8x128xf32>
    %cst_26 = arith.constant 2.44513416 : f32
    %96 = vector.broadcast %cst_26 : f32 to vector<8x128xf32>
    %97 = arith.addf %95, %96 : vector<8x128xf32>
    %98 = arith.mulf %97, %74 : vector<8x128xf32>
    %cst_27 = arith.constant 3.7544086 : f32
    %99 = vector.broadcast %cst_27 : f32 to vector<8x128xf32>
    %100 = arith.addf %98, %99 : vector<8x128xf32>
    %101 = arith.mulf %100, %74 : vector<8x128xf32>
    %cst_28 = arith.constant 1.000000e+00 : f32
    %102 = vector.broadcast %cst_28 : f32 to vector<8x128xf32>
    %103 = arith.addf %101, %102 : vector<8x128xf32>
    %104 = arith.divf %90, %103 : vector<8x128xf32>
    %cst_29 = arith.constant 0.000000e+00 : f32
    %105 = vector.broadcast %cst_29 : f32 to vector<8x128xf32>
    %106 = arith.cmpf ogt, %30, %105 : vector<8x128xf32>
    %cst_30 = arith.constant 0.000000e+00 : f32
    %107 = vector.broadcast %cst_30 : f32 to vector<8x128xf32>
    %108 = arith.subf %107, %104 : vector<8x128xf32>
    %109 = arith.select %106, %108, %104 : vector<8x128xi1>, vector<8x128xf32>
    %110 = math.absf %30 : vector<8x128xf32>
    %cst_31 = arith.constant 5.000000e-01 : f32
    %cst_32 = arith.constant 2.425000e-02 : f32
    %111 = arith.subf %cst_31, %cst_32 : f32
    %112 = vector.broadcast %111 : f32 to vector<8x128xf32>
    %113 = arith.cmpf ogt, %110, %112 : vector<8x128xf32>
    %114 = arith.select %113, %109, %65 : vector<8x128xi1>, vector<8x128xf32>
    %c0_33 = arith.constant 0 : index
    %115 = memref.load %arg1[%c0_33] : memref<1xf32, #tpu.memory_space<smem>>
    %116 = vector.extract_strided_slice %114 {offsets = [0, 0], sizes = [1, 1], strides = [1, 1]} : vector<8x128xf32> to vector<1x1xf32>
    %117 = vector.broadcast %115 : f32 to vector<1x1xf32>
    %118 = arith.mulf %117, %116 : vector<1x1xf32>
    %c0_34 = arith.constant 0 : index
    %c0_35 = arith.constant 0 : index
    %119 = vector.load %arg2[%c0_34, %c0_35] : memref<1x1xf32, #tpu.memory_space<vmem>>, vector<1x1xf32>
    tpu.vector_store %arg2[%c0_34, %c0_35], %118 {strides = array<i32>} : memref<1x1xf32, #tpu.memory_space<vmem>>, vector<1x1xf32>,
    return
  }
}

</mosaic_0001>

<llo_original>
// kernel: _scaled_normal_scalar.1
$region0: #{_scaled_normal_scalar.1}
  #allocation0 [shape = 'u32[]', space=smem, size = 0x4, offset = 0x4, fixed_abs, tag = 'smem constant byte address 0x4 - core index']
  #allocation1 [shape = 'u32[144,128]{1,0:T(1,128)}', space=vmem, size = 0x12000, scoped, tag = 'internal scratch']
  #allocation2 [shape = 's32[1]{0:T(128)S(6)}', space=smem, size = 0x200, scoped, tag = 'scoped memory for _scaled_normal_scalar.1']
  #allocation3 [shape = 'f32[1]{0:T(128)S(6)}', space=smem, size = 0x200, scoped, tag = 'scoped memory for _scaled_normal_scalar.1']
  %s0 = inlined_call_operand.<no memory space> [shape: s32[1], index: 0, kind: input, shape index: {}]
  %s1 = inlined_call_operand.<no memory space> [shape: f32[1], index: 1, kind: input, shape index: {}]
  %s2 = inlined_call_operand.hbm [shape: f32[1,1], index: 2, kind: output, shape index: {}]
  %s3 = sld [smem:[#allocation0]]
  $region18: #{_scaled_normal_scalar.1} parent=0
    _
  %s5 = ssub.s32 1, %s3
  %s6 = scalar_select 0, %s5, %s3
  %7 = sst [smem:[#allocation2]] %s0
  %8 = sst [smem:[#allocation3]] %s1
  $region1: #{_scaled_normal_scalar.1} parent=0
    #allocation4 [shape = 'u8[512]{0}', space=vmem, size = 0x400, scoped, tag = 'output window, operand 0, single buffered']
    #allocation5 [shape = 's32[1]{0}', space=sflag, size = 0x4, scoped, tag = 'scoped memory for _scaled_normal_scalar.1']
    %9 = vsyncpa [#allocation5], 0
    // Predicated region
    $region2: #{_scaled_normal_scalar.1} parent=1 // pred_check
      _
    $region3: #{_scaled_normal_scalar.1} parent=1 // pred_check_branch
      %11 = sbr.rel (0) target = $region5
    $region4: #{_scaled_normal_scalar.1} parent=1 // pred_region
      _
    $region5: #{_scaled_normal_scalar.1} parent=1 // pred_fallthru
      _
    // Predicated region
    $region6: #{_scaled_normal_scalar.1} parent=1 // pred_check
      _
    $region7: #{_scaled_normal_scalar.1} parent=1 // pred_check_branch
      %13 = sbr.rel (0) target = $region9
    $region8: #{_scaled_normal_scalar.1} parent=1 // pred_region
      _
    $region9: #{_scaled_normal_scalar.1} parent=1 // pred_fallthru
      _
    %v14 = vlaneseq
    %v15 = vshrl.u32 %v14, 7
    %v16 = vlaneseq
    %v17 = vand.u32 %v16, 127
    %v18 = vmul.u32 %v15, 128
    %v19 = vadd.s32 %v18, %v17
    %s20 = sld [smem:[#allocation2]]
    %s21 = smul.u32 %s20, 1000003
    %v22 = vstv %s21
    %v23 = vadd.s32 %v19, %v22
    %v24 = vshrl.u32 %v23, 16
    %v25 = vxor.u32 %v23, %v24
    %v26 = vmul.u32 %v25, 2146121005
    %v27 = vshrl.u32 %v26, 15
    %v28 = vxor.u32 %v26, %v27
    %v29 = vmul.u32 %v28, 2221713035
    %v30 = vshrl.u32 %v29, 16
    %v31 = vxor.u32 %v29, %v30
    %v32 = vshrl.u32 %v31, 8
    %v33 = vcvt.s32.f32 %v32
    %v34 = vadd.f32 %v33, 0.5
    %v35 = vmul.f32 %v34, 5.9604645e-08
    %v36 = vsub.f32 %v35, 0.5
    %v37 = vmul.f32 %v36, %v36
    %v38 = vmul.f32 %v37, -39.69683
    %v39 = vadd.f32 %v38, 220.9461
    %v40 = vmul.f32 %v39, %v37
    %v41 = vadd.f32 %v40, -275.9285
    %v42 = vmul.f32 %v41, %v37
    %v43 = vadd.f32 %v42, 138.35776
    %v44 = vmul.f32 %v43, %v37
    %v45 = vadd.f32 %v44, -30.664799
    %v46 = vmul.f32 %v45, %v37
    %v47 = vadd.f32 %v46, 2.5066283
    %v48 = vmul.f32 %v37, -54.476097
    %v49 = vadd.f32 %v48, 161.58583
    %v50 = vmul.f32 %v49, %v37
    %v51 = vadd.f32 %v50, -155.69897
    %v52 = vmul.f32 %v51, %v37
    %v53 = vadd.f32 %v52, 66.801315
    %v54 = vmul.f32 %v53, %v37
    %v55 = vadd.f32 %v54, -13.280682
    %v56 = vmul.f32 %v55, %v37
    %v57 = vadd.f32 %v56, 1.0
    %v58 = vmul.f32 %v36, %v47
    %v59 = vrcp.pop %v57
    %v60 = vmul.f32 %v58, %v59
    %v61 = vsub.f32 1.0, %v35
    %v62 = vmin.f32 %v35, %v61
    %v63 = vmax.f32 %v62, 1e-07
    %v64 = vlog2.pop %v63
    %v65 = vmul.f32 %v64, 0.6931472
    %v66 = vmul.f32 %v65, -2.0
    %v67 = vrsqrt.pop %v66
    %v68 = vmul.f32 %v66, %v67
    %vm69 = vcmp.eq.f32.partialorder %v66, inf
    %v70 = vsel %vm69, %v66, %v68
    %vm71 = vcmp.eq.f32.partialorder %v66, 0.0
    %v72 = vand.u32 %v66, 2147483648
    %v73 = vsel %vm71, %v72, %v70
    %v74 = vmul.f32 %v73, -0.007784894
    %v75 = vadd.f32 %v74, -0.32239646
    %v76 = vmul.f32 %v75, %v73
    %v77 = vadd.f32 %v76, -2.4007583
    %v78 = vmul.f32 %v77, %v73
    %v79 = vadd.f32 %v78, -2.5497324
    %v80 = vmul.f32 %v79, %v73
    %v81 = vadd.f32 %v80, 4.3746643
    %v82 = vmul.f32 %v81, %v73
    %v83 = vadd.f32 %v82, 2.938164
    %v84 = vmul.f32 %v73, 0.007784696
    %v85 = vadd.f32 %v84, 0.32246712
    %v86 = vmul.f32 %v85, %v73
    %v87 = vadd.f32 %v86, 2.4451342
    %v88 = vmul.f32 %v87, %v73
    %v89 = vadd.f32 %v88, 3.7544086
    %v90 = vmul.f32 %v89, %v73
    %v91 = vadd.f32 %v90, 1.0
    %v92 = vrcp.pop %v91
    %v93 = vmul.f32 %v83, %v92
    %vm94 = vcmp.gt.f32.partialorder %v36, 0.0
    %v95 = vsub.f32 0.0, %v93
    %v96 = vsel %vm94, %v95, %v93
    %v97 = vand.u32 2147483647, %v36
    %vm98 = vcmp.gt.f32.partialorder %v97, 0.47575
    %v99 = vsel %vm98, %v96, %v60
    %s100 = sld [smem:[#allocation3]]
    %v101 = vstv %s100
    %v102 = vmul.f32 %v101, %v99
    %vm103 = vcmask 0
    %104 = vst.msk [vmem:[#allocation4] sm:$0x1] %vm103, %v102
    // Predicated region
    $region10: #{_scaled_normal_scalar.1} parent=1 // pred_check
      _
    $region11: #{_scaled_normal_scalar.1} parent=1 // pred_check_branch
      %106 = sbr.rel (0) target = $region13
    $region12: #{_scaled_normal_scalar.1} parent=1 // pred_region
      %s108 = ssub.s32 16, 16
      %109 = vsyncadd [#allocation5], %s108
      %s111 = sshll.u32 [#allocation4], 4
      %s112 = int_to_ptr.vmem [resolvable:$true] %s111
      %114 = dma.vmem_to_hbm [thread:$0]  %s112, 16, %s2, [#allocation5]
    $region13: #{_scaled_normal_scalar.1} parent=1 // pred_fallthru
      _
    // Predicated region
    $region14: #{_scaled_normal_scalar.1} parent=1 // pred_check
      _
    $region15: #{_scaled_normal_scalar.1} parent=1 // pred_check_branch
      %116 = sbr.rel (0) target = $region17
    $region16: #{_scaled_normal_scalar.1} parent=1 // pred_region
      %117 = dma.done [#allocation5], 16
    $region17: #{_scaled_normal_scalar.1} parent=1 // pred_fallthru
      _
    %118 = vsyncpa [#allocation5], 1

</llo_original>
